<compile_context>
chip_gen: v7x
topology: tpu7x:2x2x1
jax: 0.10.0
libtpu: 0.0.40
codegen_flags: <defaults>
</compile_context>

<pallas_src>
from functools import partial

import jax
import jax.numpy as jnp
from jax import lax
from jax.experimental import pallas as pl
from jax.experimental.pallas import tpu as pltpu

LN_EPS = 1e-3  # matches norm_args eps=0.001


def _round_up(x, m):
    return ((x + m - 1) // m) * m


# ----------------------------------------------------------------------------
# Pallas kernel: fused [Linear -> LayerNorm -> SiLU] x n_layers -> head Linear
# ----------------------------------------------------------------------------
def _actor_mlp_kernel(x_ref, *refs):
    # refs layout: [w1, g1, b1, ..., wn, gn, bn, w_head, b_head, o_ref]
    o_ref = refs[-1]
    wh_ref = refs[-3]
    bh_ref = refs[-2]
    n_layers = (len(refs) - 3) // 3

    h = x_ref[...]  # bf16 (tm, K)
    for l in range(n_layers):
        w_ref = refs[3 * l + 0]
        g_ref = refs[3 * l + 1]
        b_ref = refs[3 * l + 2]
        # Linear (bias=False): bf16 operands, f32 accumulation on the MXU.
        acc = jnp.dot(h, w_ref[...], preferred_element_type=jnp.float32)
        # LayerNorm over the feature dim (biased var, eps=1e-3), f32 math.
        mean = jnp.mean(acc, axis=-1, keepdims=True)
        cen = acc - mean
        var = jnp.mean(cen * cen, axis=-1, keepdims=True)
        y = cen * lax.rsqrt(var + LN_EPS) * g_ref[...] + b_ref[...]
        # SiLU (sigmoid goes to the EUP slot, effectively free next to the MXU).
        y = y * jax.nn.sigmoid(y)
        h = y.astype(jnp.bfloat16)

    # Concatenated action heads (with bias). Output columns are padded to a
    # multiple of 128 outside -> lane-dense store here.
    logits = jnp.dot(h, wh_ref[...], preferred_element_type=jnp.float32) + bh_ref[...]
    o_ref[...] = logits.astype(o_ref.dtype)


def _actor_backbone_logits(state, mlp_params, head_w, head_b):
    """Fused MLP backbone + heads. Returns raw pre-dist logits (B, sum(actions_dim))."""
    B, K = state.shape
    D = mlp_params[0][0].shape[1]
    A = head_w.shape[1]
    A_pad = _round_up(A, 128)  # lane-dense output

    # Zero-pad the head columns (no LayerNorm after the head -> padding is exact).
    head_w_p = jnp.pad(head_w, ((0, 0), (0, A_pad - A))).astype(jnp.bfloat16)
    head_b_p = jnp.pad(head_b.reshape(1, -1), ((0, 0), (0, A_pad - A)))

    # Batch tiling: one big tile if the batch is small, 256-row tiles otherwise.
    tm = min(256, _round_up(B, 8))
    B_pad = _round_up(B, tm)
    x = state
    if B_pad != B:
        x = jnp.pad(x, ((0, B_pad - B), (0, 0)))
    x = x.astype(jnp.bfloat16)

    ins = [x]
    in_specs = [pl.BlockSpec((tm, K), lambda i: (i, 0))]
    for (w, g, b) in mlp_params:
        din, dout = w.shape
        ins += [w.astype(jnp.bfloat16), g.reshape(1, -1), b.reshape(1, -1)]
        in_specs += [
            pl.BlockSpec((din, dout), lambda i: (0, 0)),
            pl.BlockSpec((1, dout), lambda i: (0, 0)),
            pl.BlockSpec((1, dout), lambda i: (0, 0)),
        ]
    ins += [head_w_p, head_b_p]
    in_specs += [
        pl.BlockSpec((D, A_pad), lambda i: (0, 0)),
        pl.BlockSpec((1, A_pad), lambda i: (0, 0)),
    ]

    # Cost estimate (advisory, helps XLA schedule the tiny surrounding ops).
    n_layers = len(mlp_params)
    w_elems = sum(w.shape[0] * w.shape[1] for (w, _, _) in mlp_params)
    flops = 2 * B_pad * (w_elems + D * A_pad)
    transcendentals = B_pad * n_layers * (D + 1)  # sigmoids + rsqrt per row
    bytes_accessed = (
        x.size * 2
        + sum(w.size * 2 + g.size * 4 + b.size * 4 for (w, g, b) in mlp_params)
        + head_w_p.size * 2 + head_b_p.size * 4
        + B_pad * A_pad * 4
    )

    out = pl.pallas_call(
        _actor_mlp_kernel,
        out_shape=jax.ShapeDtypeStruct((B_pad, A_pad), jnp.float32),
        grid_spec=pltpu.PrefetchScalarGridSpec(
            num_scalar_prefetch=0,
            grid=(B_pad // tm,),
            in_specs=in_specs,
            out_specs=pl.BlockSpec((tm, A_pad), lambda i: (i, 0)),
        ),
        # Weights are grid-invariant (constant index_map) so they are not re-DMA'd
        # per step; total footprint is tiny, so the default scoped VMEM limit is
        # plenty even on v7x (64 MiB). Raise vmem_limit_bytes only for huge tm/D.
        compiler_params=pltpu.CompilerParams(dimension_semantics=("parallel",)),
        cost_estimate=pl.CostEstimate(
            flops=flops, transcendentals=transcendentals, bytes_accessed=bytes_accessed
        ),
    )(*ins)
    return out[:B, :A]


# ----------------------------------------------------------------------------
# Actor forward (discrete branch)
# ----------------------------------------------------------------------------
def _uniform_mix(logits, unimix):
    if unimix > 0.0:
        probs = jax.nn.softmax(logits, axis=-1)
        probs = (1.0 - unimix) * probs + unimix / logits.shape[-1]
        logits = jnp.log(probs)  # probs_to_logits on normalized probs
    return logits


def actor_forward(state, params, actions_dim, *, unimix=0.01, is_training=True, key=None):
    """Returns (tuple_of_actions, tuple_of_normalized_logits)."""
    mlp_params, head_w, head_b = params
    logits_all = _actor_backbone_logits(state, mlp_params, head_w, head_b)

    if is_training and key is None:
        raise ValueError("is_training=True requires a PRNG key for sampling.")
    keys = jax.random.split(key, len(actions_dim)) if is_training else [None] * len(actions_dim)

    actions, dists = [], []
    off = 0
    for i, adim in enumerate(actions_dim):
        l = _uniform_mix(logits_all[:, off:off + adim], unimix)
        off += adim
        dists.append(l)
        if is_training:
            # OneHotCategoricalStraightThrough.rsample
            idx = jax.random.categorical(keys[i], l, axis=-1)
            onehot = jax.nn.one_hot(idx, adim, dtype=jnp.float32)
            probs = jnp.exp(l)
            act = onehot + probs - lax.stop_gradient(probs)
        else:
            # .mode
            idx = jnp.argmax(l, axis=-1)
            act = jax.nn.one_hot(idx, adim, dtype=jnp.float32)
        actions.append(act)
    # TODO(synk): continuous branches (normal / tanh_normal / trunc_normal rsample,
    # TruncatedNormal, TanhTransform) are not translated; only the discrete path is.
    return tuple(actions), tuple(dists)


# ----------------------------------------------------------------------------
# Pure-JAX reference (f32) for correctness checking
# ----------------------------------------------------------------------------
def reference_forward(state, params, actions_dim, *, unimix=0.01):
    mlp_params, head_w, head_b = params
    h = state
    for w, g, b in mlp_params:
        h = h @ w
        mean = jnp.mean(h, axis=-1, keepdims=True)
        var = jnp.mean((h - mean) ** 2, axis=-1, keepdims=True)
        h = (h - mean) * lax.rsqrt(var + LN_EPS) * g.reshape(1, -1) + b.reshape(1, -1)
        h = h * jax.nn.sigmoid(h)
    logits_all = h @ head_w + head_b.reshape(1, -1)
    actions, dists = [], []
    off = 0
    for adim in actions_dim:
        l = _uniform_mix(logits_all[:, off:off + adim], unimix)
        off += adim
        dists.append(l)
        actions.append(jax.nn.one_hot(jnp.argmax(l, axis=-1), adim, dtype=jnp.float32))
    return tuple(actions), tuple(dists)


# ----------------------------------------------------------------------------
# Deterministic parameter init (shapes mirror the torch module's __init__)
# ----------------------------------------------------------------------------
def init_params(key, latent_state_size, dense_units, mlp_layers, actions_dim):
    dims = [latent_state_size] + [dense_units] * mlp_layers
    mlp = []
    for i in range(mlp_layers):
        key, k1, k2, k3 = jax.random.split(key, 4)
        fan_in = dims[i]
        w = jax.random.normal(k1, (dims[i], dims[i + 1]), jnp.float32) / jnp.sqrt(fan_in)
        g = 1.0 + 0.1 * jax.random.normal(k2, (dims[i + 1],), jnp.float32)  # LN weight
        b = 0.1 * jax.random.normal(k3, (dims[i + 1],), jnp.float32)        # LN bias
        mlp.append((w, g, b))
    A = int(sum(actions_dim))
    key, k1, k2 = jax.random.split(key, 3)
    head_w = jax.random.normal(k1, (dense_units, A), jnp.float32) / jnp.sqrt(dense_units)
    head_b = 0.01 * jax.random.normal(k2, (A,), jnp.float32)
    return (mlp, head_w, head_b)


if __name__ == "__main__":
    key = jax.random.PRNGKey(0)

    # Small synthetic config (real module: latent ~1536, dense_units=400).
    latent_state_size = 128
    dense_units = 128
    mlp_layers = 4
    actions_dim = (6, 4)       # two discrete action heads
    batch = 2

    key, kx, kp, ks = jax.random.split(key, 4)
    state = jax.random.normal(kx, (batch, latent_state_size), jnp.float32)
    params = init_params(kp, latent_state_size, dense_units, mlp_layers, actions_dim)

    # Training path (stochastic rsample) — exercise it and block on the result.
    tr_actions, tr_dists = actor_forward(
        state, params, actions_dim, is_training=True, key=ks)
    for a in tr_actions:
        a.block_until_ready()

    # Eval path (deterministic mode) — compare against the pure-JAX reference.
    actions, dists = actor_forward(state, params, actions_dim, is_training=False)
    for a in actions:
        a.block_until_ready()

    ref_actions, ref_dists = reference_forward(state, params, actions_dim)

    for a, d, rd, adim in zip(actions, dists, ref_dists, actions_dim):
        assert a.shape == (batch, adim), a.shape
        assert d.shape == (batch, adim), d.shape
        # bf16 matmul operands -> loose tolerance on the normalized logits
        assert jnp.allclose(d, rd, atol=5e-2, rtol=5e-2), float(jnp.max(jnp.abs(d - rd)))
        # actions are valid one-hot vectors
        assert jnp.allclose(a.sum(-1), 1.0)
        assert jnp.all((a == 0.0) | (a == 1.0))

    print("KERNEL_OK")
</pallas_src>

<mosaic_0001>
module attributes {stable_mosaic.version = 11 : i64} {
  func.func @_actor_mlp_kernel(%arg0: i32, %arg1: memref<8x128xbf16, #tpu.memory_space<vmem>>, %arg2: memref<128x128xbf16, #tpu.memory_space<vmem>>, %arg3: memref<1x128xf32, #tpu.memory_space<vmem>>, %arg4: memref<1x128xf32, #tpu.memory_space<vmem>>, %arg5: memref<128x128xbf16, #tpu.memory_space<vmem>>, %arg6: memref<1x128xf32, #tpu.memory_space<vmem>>, %arg7: memref<1x128xf32, #tpu.memory_space<vmem>>, %arg8: memref<128x128xbf16, #tpu.memory_space<vmem>>, %arg9: memref<1x128xf32, #tpu.memory_space<vmem>>, %arg10: memref<1x128xf32, #tpu.memory_space<vmem>>, %arg11: memref<128x128xbf16, #tpu.memory_space<vmem>>, %arg12: memref<1x128xf32, #tpu.memory_space<vmem>>, %arg13: memref<1x128xf32, #tpu.memory_space<vmem>>, %arg14: memref<128x128xbf16, #tpu.memory_space<vmem>>, %arg15: memref<1x128xf32, #tpu.memory_space<vmem>>, %arg16: memref<8x128xf32, #tpu.memory_space<vmem>>) attributes {dimension_semantics = [#tpu.dimension_semantics<parallel>], iteration_bounds = array<i64: 1>, scalar_prefetch = 0 : i64, scratch_operands = 0 : i64, tpu.core_type = #tpu.core_type<tc>, window_params = [{transform_indices = @transform_0, window_bounds = array<i64: 8, 128>}, {pipeline_mode = #tpu.pipeline_mode<synchronous>, transform_indices = @transform_1, window_bounds = array<i64: 128, 128>}, {pipeline_mode = #tpu.pipeline_mode<synchronous>, transform_indices = @transform_2, window_bounds = array<i64: 1, 128>}, {pipeline_mode = #tpu.pipeline_mode<synchronous>, transform_indices = @transform_3, window_bounds = array<i64: 1, 128>}, {pipeline_mode = #tpu.pipeline_mode<synchronous>, transform_indices = @transform_4, window_bounds = array<i64: 128, 128>}, {pipeline_mode = #tpu.pipeline_mode<synchronous>, transform_indices = @transform_5, window_bounds = array<i64: 1, 128>}, {pipeline_mode = #tpu.pipeline_mode<synchronous>, transform_indices = @transform_6, window_bounds = array<i64: 1, 128>}, {pipeline_mode = #tpu.pipeline_mode<synchronous>, transform_indices = @transform_7, window_bounds = array<i64: 128, 128>}, {pipeline_mode = #tpu.pipeline_mode<synchronous>, transform_indices = @transform_8, window_bounds = array<i64: 1, 128>}, {pipeline_mode = #tpu.pipeline_mode<synchronous>, transform_indices = @transform_9, window_bounds = array<i64: 1, 128>}, {pipeline_mode = #tpu.pipeline_mode<synchronous>, transform_indices = @transform_10, window_bounds = array<i64: 128, 128>}, {pipeline_mode = #tpu.pipeline_mode<synchronous>, transform_indices = @transform_11, window_bounds = array<i64: 1, 128>}, {pipeline_mode = #tpu.pipeline_mode<synchronous>, transform_indices = @transform_12, window_bounds = array<i64: 1, 128>}, {pipeline_mode = #tpu.pipeline_mode<synchronous>, transform_indices = @transform_13, window_bounds = array<i64: 128, 128>}, {pipeline_mode = #tpu.pipeline_mode<synchronous>, transform_indices = @transform_14, window_bounds = array<i64: 1, 128>}, {transform_indices = @transform_15, window_bounds = array<i64: 8, 128>}]} {
    %c0 = arith.constant 0 : index
    %c0_0 = arith.constant 0 : index
    %0 = vector.load %arg1[%c0, %c0_0] : memref<8x128xbf16, #tpu.memory_space<vmem>>, vector<8x128xbf16>
    %c0_1 = arith.constant 0 : index
    %c0_2 = arith.constant 0 : index
    %1 = vector.load %arg2[%c0_1, %c0_2] : memref<128x128xbf16, #tpu.memory_space<vmem>>, vector<128x128xbf16>
    %cst = arith.constant dense<0.000000e+00> : vector<8x128xf32>
    %2 = tpu.matmul %0, %1, %cst {dimension_numbers = #tpu.dot_dimension_numbers<[1], [0], [0], [1], [0, 0, 1, 1], [], []>} : vector<8x128xbf16>, vector<128x128xbf16>, vector<8x128xf32> -> vector<8x128xf32>
    %cst_3 = arith.constant dense<0.000000e+00> : vector<8xf32>
    %3 = vector.multi_reduction <add>, %2, %cst_3 [1] : vector<8x128xf32> to vector<8xf32>
    %4 = vector.shape_cast %3 : vector<8xf32> to vector<8x1xf32>
    %cst_4 = arith.constant 1.280000e+02 : f32
    %5 = vector.broadcast %cst_4 : f32 to vector<8x1xf32>
    %6 = arith.divf %4, %5 : vector<8x1xf32>
    %7 = vector.broadcast %6 : vector<8x1xf32> to vector<8x128xf32>
    %8 = arith.subf %2, %7 : vector<8x128xf32>
    %9 = arith.mulf %8, %8 : vector<8x128xf32>
    %cst_5 = arith.constant dense<0.000000e+00> : vector<8xf32>
    %10 = vector.multi_reduction <add>, %9, %cst_5 [1] : vector<8x128xf32> to vector<8xf32>
    %11 = vector.shape_cast %10 : vector<8xf32> to vector<8x1xf32>
    %cst_6 = arith.constant 1.280000e+02 : f32
    %12 = vector.broadcast %cst_6 : f32 to vector<8x1xf32>
    %13 = arith.divf %11, %12 : vector<8x1xf32>
    %cst_7 = arith.constant 1.000000e-03 : f32
    %14 = vector.broadcast %cst_7 : f32 to vector<8x1xf32>
    %15 = arith.addf %13, %14 : vector<8x1xf32>
    %16 = math.rsqrt %15 : vector<8x1xf32>
    %17 = vector.broadcast %16 : vector<8x1xf32> to vector<8x128xf32>
    %18 = arith.mulf %8, %17 : vector<8x128xf32>
    %c0_8 = arith.constant 0 : index
    %c0_9 = arith.constant 0 : index
    %19 = vector.load %arg3[%c0_8, %c0_9] : memref<1x128xf32, #tpu.memory_space<vmem>>, vector<1x128xf32>
    %20 = vector.broadcast %19 : vector<1x128xf32> to vector<8x128xf32>
    %21 = arith.mulf %18, %20 : vector<8x128xf32>
    %c0_10 = arith.constant 0 : index
    %c0_11 = arith.constant 0 : index
    %22 = vector.load %arg4[%c0_10, %c0_11] : memref<1x128xf32, #tpu.memory_space<vmem>>, vector<1x128xf32>
    %23 = vector.broadcast %22 : vector<1x128xf32> to vector<8x128xf32>
    %24 = arith.addf %21, %23 : vector<8x128xf32>
    %25 = arith.negf %24 : vector<8x128xf32>
    %26 = math.exp %25 : vector<8x128xf32>
    %cst_12 = arith.constant 1.000000e+00 : f32
    %27 = vector.broadcast %cst_12 : f32 to vector<8x128xf32>
    %28 = arith.addf %27, %26 : vector<8x128xf32>
    %29 = arith.divf %27, %28 : vector<8x128xf32>
    %30 = arith.mulf %24, %29 : vector<8x128xf32>
    %31 = arith.truncf %30 : vector<8x128xf32> to vector<8x128xbf16>
    %c0_13 = arith.constant 0 : index
    %c0_14 = arith.constant 0 : index
    %32 = vector.load %arg5[%c0_13, %c0_14] : memref<128x128xbf16, #tpu.memory_space<vmem>>, vector<128x128xbf16>
    %cst_15 = arith.constant dense<0.000000e+00> : vector<8x128xf32>
    %33 = tpu.matmul %31, %32, %cst_15 {dimension_numbers = #tpu.dot_dimension_numbers<[1], [0], [0], [1], [0, 0, 1, 1], [], []>} : vector<8x128xbf16>, vector<128x128xbf16>, vector<8x128xf32> -> vector<8x128xf32>
    %cst_16 = arith.constant dense<0.000000e+00> : vector<8xf32>
    %34 = vector.multi_reduction <add>, %33, %cst_16 [1] : vector<8x128xf32> to vector<8xf32>
    %35 = vector.shape_cast %34 : vector<8xf32> to vector<8x1xf32>
    %cst_17 = arith.constant 1.280000e+02 : f32
    %36 = vector.broadcast %cst_17 : f32 to vector<8x1xf32>
    %37 = arith.divf %35, %36 : vector<8x1xf32>
    %38 = vector.broadcast %37 : vector<8x1xf32> to vector<8x128xf32>
    %39 = arith.subf %33, %38 : vector<8x128xf32>
    %40 = arith.mulf %39, %39 : vector<8x128xf32>
    %cst_18 = arith.constant dense<0.000000e+00> : vector<8xf32>
    %41 = vector.multi_reduction <add>, %40, %cst_18 [1] : vector<8x128xf32> to vector<8xf32>
    %42 = vector.shape_cast %41 : vector<8xf32> to vector<8x1xf32>
    %cst_19 = arith.constant 1.280000e+02 : f32
    %43 = vector.broadcast %cst_19 : f32 to vector<8x1xf32>
    %44 = arith.divf %42, %43 : vector<8x1xf32>
    %cst_20 = arith.constant 1.000000e-03 : f32
    %45 = vector.broadcast %cst_20 : f32 to vector<8x1xf32>
    %46 = arith.addf %44, %45 : vector<8x1xf32>
    %47 = math.rsqrt %46 : vector<8x1xf32>
    %48 = vector.broadcast %47 : vector<8x1xf32> to vector<8x128xf32>
    %49 = arith.mulf %39, %48 : vector<8x128xf32>
    %c0_21 = arith.constant 0 : index
    %c0_22 = arith.constant 0 : index
    %50 = vector.load %arg6[%c0_21, %c0_22] : memref<1x128xf32, #tpu.memory_space<vmem>>, vector<1x128xf32>
    %51 = vector.broadcast %50 : vector<1x128xf32> to vector<8x128xf32>
    %52 = arith.mulf %49, %51 : vector<8x128xf32>
    %c0_23 = arith.constant 0 : index
    %c0_24 = arith.constant 0 : index
    %53 = vector.load %arg7[%c0_23, %c0_24] : memref<1x128xf32, #tpu.memory_space<vmem>>, vector<1x128xf32>
    %54 = vector.broadcast %53 : vector<1x128xf32> to vector<8x128xf32>
    %55 = arith.addf %52, %54 : vector<8x128xf32>
    %56 = arith.negf %55 : vector<8x128xf32>
    %57 = math.exp %56 : vector<8x128xf32>
    %cst_25 = arith.constant 1.000000e+00 : f32
    %58 = vector.broadcast %cst_25 : f32 to vector<8x128xf32>
    %59 = arith.addf %58, %57 : vector<8x128xf32>
    %60 = arith.divf %58, %59 : vector<8x128xf32>
    %61 = arith.mulf %55, %60 : vector<8x128xf32>
    %62 = arith.truncf %61 : vector<8x128xf32> to vector<8x128xbf16>
    %c0_26 = arith.constant 0 : index
    %c0_27 = arith.constant 0 : index
    %63 = vector.load %arg8[%c0_26, %c0_27] : memref<128x128xbf16, #tpu.memory_space<vmem>>, vector<128x128xbf16>
    %cst_28 = arith.constant dense<0.000000e+00> : vector<8x128xf32>
    %64 = tpu.matmul %62, %63, %cst_28 {dimension_numbers = #tpu.dot_dimension_numbers<[1], [0], [0], [1], [0, 0, 1, 1], [], []>} : vector<8x128xbf16>, vector<128x128xbf16>, vector<8x128xf32> -> vector<8x128xf32>
    %cst_29 = arith.constant dense<0.000000e+00> : vector<8xf32>
    %65 = vector.multi_reduction <add>, %64, %cst_29 [1] : vector<8x128xf32> to vector<8xf32>
    %66 = vector.shape_cast %65 : vector<8xf32> to vector<8x1xf32>
    %cst_30 = arith.constant 1.280000e+02 : f32
    %67 = vector.broadcast %cst_30 : f32 to vector<8x1xf32>
    %68 = arith.divf %66, %67 : vector<8x1xf32>
    %69 = vector.broadcast %68 : vector<8x1xf32> to vector<8x128xf32>
    %70 = arith.subf %64, %69 : vector<8x128xf32>
    %71 = arith.mulf %70, %70 : vector<8x128xf32>
    %cst_31 = arith.constant dense<0.000000e+00> : vector<8xf32>
    %72 = vector.multi_reduction <add>, %71, %cst_31 [1] : vector<8x128xf32> to vector<8xf32>
    %73 = vector.shape_cast %72 : vector<8xf32> to vector<8x1xf32>
    %cst_32 = arith.constant 1.280000e+02 : f32
    %74 = vector.broadcast %cst_32 : f32 to vector<8x1xf32>
    %75 = arith.divf %73, %74 : vector<8x1xf32>
    %cst_33 = arith.constant 1.000000e-03 : f32
    %76 = vector.broadcast %cst_33 : f32 to vector<8x1xf32>
    %77 = arith.addf %75, %76 : vector<8x1xf32>
    %78 = math.rsqrt %77 : vector<8x1xf32>
    %79 = vector.broadcast %78 : vector<8x1xf32> to vector<8x128xf32>
    %80 = arith.mulf %70, %79 : vector<8x128xf32>
    %c0_34 = arith.constant 0 : index
    %c0_35 = arith.constant 0 : index
    %81 = vector.load %arg9[%c0_34, %c0_35] : memref<1x128xf32, #tpu.memory_space<vmem>>, vector<1x128xf32>
    %82 = vector.broadcast %81 : vector<1x128xf32> to vector<8x128xf32>
    %83 = arith.mulf %80, %82 : vector<8x128xf32>
    %c0_36 = arith.constant 0 : index
    %c0_37 = arith.constant 0 : index
    %84 = vector.load %arg10[%c0_36, %c0_37] : memref<1x128xf32, #tpu.memory_space<vmem>>, vector<1x128xf32>
    %85 = vector.broadcast %84 : vector<1x128xf32> to vector<8x128xf32>
    %86 = arith.addf %83, %85 : vector<8x128xf32>
    %87 = arith.negf %86 : vector<8x128xf32>
    %88 = math.exp %87 : vector<8x128xf32>
    %cst_38 = arith.constant 1.000000e+00 : f32
    %89 = vector.broadcast %cst_38 : f32 to vector<8x128xf32>
    %90 = arith.addf %89, %88 : vector<8x128xf32>
    %91 = arith.divf %89, %90 : vector<8x128xf32>
    %92 = arith.mulf %86, %91 : vector<8x128xf32>
    %93 = arith.truncf %92 : vector<8x128xf32> to vector<8x128xbf16>
    %c0_39 = arith.constant 0 : index
    %c0_40 = arith.constant 0 : index
    %94 = vector.load %arg11[%c0_39, %c0_40] : memref<128x128xbf16, #tpu.memory_space<vmem>>, vector<128x128xbf16>
    %cst_41 = arith.constant dense<0.000000e+00> : vector<8x128xf32>
    %95 = tpu.matmul %93, %94, %cst_41 {dimension_numbers = #tpu.dot_dimension_numbers<[1], [0], [0], [1], [0, 0, 1, 1], [], []>} : vector<8x128xbf16>, vector<128x128xbf16>, vector<8x128xf32> -> vector<8x128xf32>
    %cst_42 = arith.constant dense<0.000000e+00> : vector<8xf32>
    %96 = vector.multi_reduction <add>, %95, %cst_42 [1] : vector<8x128xf32> to vector<8xf32>
    %97 = vector.shape_cast %96 : vector<8xf32> to vector<8x1xf32>
    %cst_43 = arith.constant 1.280000e+02 : f32
    %98 = vector.broadcast %cst_43 : f32 to vector<8x1xf32>
    %99 = arith.divf %97, %98 : vector<8x1xf32>
    %100 = vector.broadcast %99 : vector<8x1xf32> to vector<8x128xf32>
    %101 = arith.subf %95, %100 : vector<8x128xf32>
    %102 = arith.mulf %101, %101 : vector<8x128xf32>
    %cst_44 = arith.constant dense<0.000000e+00> : vector<8xf32>
    %103 = vector.multi_reduction <add>, %102, %cst_44 [1] : vector<8x128xf32> to vector<8xf32>
    %104 = vector.shape_cast %103 : vector<8xf32> to vector<8x1xf32>
    %cst_45 = arith.constant 1.280000e+02 : f32
    %105 = vector.broadcast %cst_45 : f32 to vector<8x1xf32>
    %106 = arith.divf %104, %105 : vector<8x1xf32>
    %cst_46 = arith.constant 1.000000e-03 : f32
    %107 = vector.broadcast %cst_46 : f32 to vector<8x1xf32>
    %108 = arith.addf %106, %107 : vector<8x1xf32>
    %109 = math.rsqrt %108 : vector<8x1xf32>
    %110 = vector.broadcast %109 : vector<8x1xf32> to vector<8x128xf32>
    %111 = arith.mulf %101, %110 : vector<8x128xf32>
    %c0_47 = arith.constant 0 : index
    %c0_48 = arith.constant 0 : index
    %112 = vector.load %arg12[%c0_47, %c0_48] : memref<1x128xf32, #tpu.memory_space<vmem>>, vector<1x128xf32>
    %113 = vector.broadcast %112 : vector<1x128xf32> to vector<8x128xf32>
    %114 = arith.mulf %111, %113 : vector<8x128xf32>
    %c0_49 = arith.constant 0 : index
    %c0_50 = arith.constant 0 : index
    %115 = vector.load %arg13[%c0_49, %c0_50] : memref<1x128xf32, #tpu.memory_space<vmem>>, vector<1x128xf32>
    %116 = vector.broadcast %115 : vector<1x128xf32> to vector<8x128xf32>
    %117 = arith.addf %114, %116 : vector<8x128xf32>
    %118 = arith.negf %117 : vector<8x128xf32>
    %119 = math.exp %118 : vector<8x128xf32>
    %cst_51 = arith.constant 1.000000e+00 : f32
    %120 = vector.broadcast %cst_51 : f32 to vector<8x128xf32>
    %121 = arith.addf %120, %119 : vector<8x128xf32>
    %122 = arith.divf %120, %121 : vector<8x128xf32>
    %123 = arith.mulf %117, %122 : vector<8x128xf32>
    %124 = arith.truncf %123 : vector<8x128xf32> to vector<8x128xbf16>
    %c0_52 = arith.constant 0 : index
    %c0_53 = arith.constant 0 : index
    %125 = vector.load %arg14[%c0_52, %c0_53] : memref<128x128xbf16, #tpu.memory_space<vmem>>, vector<128x128xbf16>
    %cst_54 = arith.constant dense<0.000000e+00> : vector<8x128xf32>
    %126 = tpu.matmul %124, %125, %cst_54 {dimension_numbers = #tpu.dot_dimension_numbers<[1], [0], [0], [1], [0, 0, 1, 1], [], []>} : vector<8x128xbf16>, vector<128x128xbf16>, vector<8x128xf32> -> vector<8x128xf32>
    %c0_55 = arith.constant 0 : index
    %c0_56 = arith.constant 0 : index
    %127 = vector.load %arg15[%c0_55, %c0_56] : memref<1x128xf32, #tpu.memory_space<vmem>>, vector<1x128xf32>
    %128 = vector.broadcast %127 : vector<1x128xf32> to vector<8x128xf32>
    %129 = arith.addf %126, %128 : vector<8x128xf32>
    %c0_57 = arith.constant 0 : index
    %c0_58 = arith.constant 0 : index
    %130 = vector.load %arg16[%c0_57, %c0_58] : memref<8x128xf32, #tpu.memory_space<vmem>>, vector<8x128xf32>
    tpu.vector_store %arg16[%c0_57, %c0_58], %129 {strides = array<i32>} : memref<8x128xf32, #tpu.memory_space<vmem>>, vector<8x128xf32>,
    return
  }
  func.func @transform_0(%arg0: i32) -> (i32, i32) {
    %c0_i32 = arith.constant 0 : i32
    %c0_i32_0 = arith.constant 0 : i32
    return %arg0, %c0_i32 : i32, i32
  }
  func.func @transform_1(%arg0: i32) -> (i32, i32) {
    %c0_i32 = arith.constant 0 : i32
    %c0_i32_0 = arith.constant 0 : i32
    %c0_i32_1 = arith.constant 0 : i32
    return %c0_i32, %c0_i32_0 : i32, i32
  }
  func.func @transform_2(%arg0: i32) -> (i32, i32) {
    %c0_i32 = arith.constant 0 : i32
    %c0_i32_0 = arith.constant 0 : i32
    %c0_i32_1 = arith.constant 0 : i32
    return %c0_i32, %c0_i32_0 : i32, i32
  }
  func.func @transform_3(%arg0: i32) -> (i32, i32) {
    %c0_i32 = arith.constant 0 : i32
    %c0_i32_0 = arith.constant 0 : i32
    %c0_i32_1 = arith.constant 0 : i32
    return %c0_i32, %c0_i32_0 : i32, i32
  }
  func.func @transform_4(%arg0: i32) -> (i32, i32) {
    %c0_i32 = arith.constant 0 : i32
    %c0_i32_0 = arith.constant 0 : i32
    %c0_i32_1 = arith.constant 0 : i32
    return %c0_i32, %c0_i32_0 : i32, i32
  }
  func.func @transform_5(%arg0: i32) -> (i32, i32) {
    %c0_i32 = arith.constant 0 : i32
    %c0_i32_0 = arith.constant 0 : i32
    %c0_i32_1 = arith.constant 0 : i32
    return %c0_i32, %c0_i32_0 : i32, i32
  }
  func.func @transform_6(%arg0: i32) -> (i32, i32) {
    %c0_i32 = arith.constant 0 : i32
    %c0_i32_0 = arith.constant 0 : i32
    %c0_i32_1 = arith.constant 0 : i32
    return %c0_i32, %c0_i32_0 : i32, i32
  }
  func.func @transform_7(%arg0: i32) -> (i32, i32) {
    %c0_i32 = arith.constant 0 : i32
    %c0_i32_0 = arith.constant 0 : i32
    %c0_i32_1 = arith.constant 0 : i32
    return %c0_i32, %c0_i32_0 : i32, i32
  }
  func.func @transform_8(%arg0: i32) -> (i32, i32) {
    %c0_i32 = arith.constant 0 : i32
    %c0_i32_0 = arith.constant 0 : i32
    %c0_i32_1 = arith.constant 0 : i32
    return %c0_i32, %c0_i32_0 : i32, i32
  }
  func.func @transform_9(%arg0: i32) -> (i32, i32) {
    %c0_i32 = arith.constant 0 : i32
    %c0_i32_0 = arith.constant 0 : i32
    %c0_i32_1 = arith.constant 0 : i32
    return %c0_i32, %c0_i32_0 : i32, i32
  }
  func.func @transform_10(%arg0: i32) -> (i32, i32) {
    %c0_i32 = arith.constant 0 : i32
    %c0_i32_0 = arith.constant 0 : i32
    %c0_i32_1 = arith.constant 0 : i32
    return %c0_i32, %c0_i32_0 : i32, i32
  }
  func.func @transform_11(%arg0: i32) -> (i32, i32) {
    %c0_i32 = arith.constant 0 : i32
    %c0_i32_0 = arith.constant 0 : i32
    %c0_i32_1 = arith.constant 0 : i32
    return %c0_i32, %c0_i32_0 : i32, i32
  }
  func.func @transform_12(%arg0: i32) -> (i32, i32) {
    %c0_i32 = arith.constant 0 : i32
    %c0_i32_0 = arith.constant 0 : i32
    %c0_i32_1 = arith.constant 0 : i32
    return %c0_i32, %c0_i32_0 : i32, i32
  }
  func.func @transform_13(%arg0: i32) -> (i32, i32) {
    %c0_i32 = arith.constant 0 : i32
    %c0_i32_0 = arith.constant 0 : i32
    %c0_i32_1 = arith.constant 0 : i32
    return %c0_i32, %c0_i32_0 : i32, i32
  }
  func.func @transform_14(%arg0: i32) -> (i32, i32) {
    %c0_i32 = arith.constant 0 : i32
    %c0_i32_0 = arith.constant 0 : i32
    %c0_i32_1 = arith.constant 0 : i32
    return %c0_i32, %c0_i32_0 : i32, i32
  }
  func.func @transform_15(%arg0: i32) -> (i32, i32) {
    %c0_i32 = arith.constant 0 : i32
    %c0_i32_0 = arith.constant 0 : i32
    return %arg0, %c0_i32 : i32, i32
  }
}

</mosaic_0001>

<llo_original>
// kernel: tpu_custom_call.1
$region0: #{tpu_custom_call.1}
  #allocation0 [shape = 'u32[]', space=smem, size = 0x4, offset = 0x4, fixed_abs, tag = 'smem constant byte address 0x4 - core index']
  #allocation1 [shape = 'u32[144,128]{1,0:T(1,128)}', space=vmem, size = 0x12000, scoped, tag = 'internal scratch']
  %s0 = inlined_call_operand.hbm [shape: bf16[8,128], index: 0, kind: input, shape index: {}]
  %s1 = inlined_call_operand.hbm [shape: bf16[128,128], index: 1, kind: input, shape index: {}]
  %s2 = inlined_call_operand.vmem [shape: f32[1,128], index: 2, kind: input, shape index: {}]
  %s3 = inlined_call_operand.vmem [shape: f32[1,128], index: 3, kind: input, shape index: {}]
  %s4 = inlined_call_operand.hbm [shape: bf16[128,128], index: 4, kind: input, shape index: {}]
  %s5 = inlined_call_operand.vmem [shape: f32[1,128], index: 5, kind: input, shape index: {}]
  %s6 = inlined_call_operand.vmem [shape: f32[1,128], index: 6, kind: input, shape index: {}]
  %s7 = inlined_call_operand.hbm [shape: bf16[128,128], index: 7, kind: input, shape index: {}]
  %s8 = inlined_call_operand.vmem [shape: f32[1,128], index: 8, kind: input, shape index: {}]
  %s9 = inlined_call_operand.vmem [shape: f32[1,128], index: 9, kind: input, shape index: {}]
  %s10 = inlined_call_operand.hbm [shape: bf16[128,128], index: 10, kind: input, shape index: {}]
  %s11 = inlined_call_operand.vmem [shape: f32[1,128], index: 11, kind: input, shape index: {}]
  %s12 = inlined_call_operand.vmem [shape: f32[1,128], index: 12, kind: input, shape index: {}]
  %s13 = inlined_call_operand.hbm [shape: bf16[128,128], index: 13, kind: input, shape index: {}]
  %s14 = inlined_call_operand.vmem [shape: f32[1,128], index: 14, kind: input, shape index: {}]
  %s15 = inlined_call_operand.hbm [shape: f32[8,128], index: 15, kind: output, shape index: {}]
  %s16 = sld [smem:[#allocation0]]
  $region94: #{tpu_custom_call.1} parent=0
    _
  %s18 = ssub.s32 1, %s16
  %s19 = scalar_select 0, %s18, %s16
  $region1: #{tpu_custom_call.1} parent=0
    #allocation2 [shape = 'u8[2048]{0}', space=vmem, size = 0x800, scoped, tag = 'input window, operand 0, single buffered']
    #allocation3 [shape = 's32[1]{0}', space=sflag, size = 0x4, scoped, tag = 'scoped memory for tpu_custom_call.1']
    #allocation4 [shape = 's32[1]{0}', space=sflag, size = 0x4, scoped, tag = 'scoped memory for tpu_custom_call.1']
    #allocation5 [shape = 'u8[32768]{0}', space=vmem, size = 0x8000, scoped, tag = 'input window, operand 1, single buffered']
    #allocation6 [shape = 's32[1]{0}', space=sflag, size = 0x4, scoped, tag = 'scoped memory for tpu_custom_call.1']
    #allocation7 [shape = 'u8[32768]{0}', space=vmem, size = 0x8000, scoped, tag = 'input window, operand 4, single buffered']
    #allocation8 [shape = 'u8[32768]{0}', space=vmem, size = 0x8000, scoped, tag = 'input window, operand 7, single buffered']
    #allocation9 [shape = 's32[1]{0}', space=sflag, size = 0x4, scoped, tag = 'scoped memory for tpu_custom_call.1']
    #allocation10 [shape = 'u8[32768]{0}', space=vmem, size = 0x8000, scoped, tag = 'input window, operand 10, single buffered']
    #allocation11 [shape = 'u8[32768]{0}', space=vmem, size = 0x8000, scoped, tag = 'input window, operand 13, single buffered']
    #allocation12 [shape = 's32[1]{0}', space=sflag, size = 0x4, scoped, tag = 'scoped memory for tpu_custom_call.1']
    #allocation13 [shape = 'u8[4096]{0}', space=vmem, size = 0x1000, scoped, tag = 'output window, operand 0, single buffered']
    %20 = vsyncpa [#allocation3], 0
    %21 = vsyncpa [#allocation6], 0
    %22 = vsyncpa [#allocation9], 0
    %23 = vsyncpa [#allocation12], 0
    %24 = vsyncpa [#allocation4], 0
    // Predicated region
    $region2: #{tpu_custom_call.1} parent=1 // pred_check
      _
    $region3: #{tpu_custom_call.1} parent=1 // pred_check_branch
      %26 = sbr.rel (0) target = $region5
    $region4: #{tpu_custom_call.1} parent=1 // pred_region
      %s28 = ssub.s32 64, 64
      %29 = vsyncadd [#allocation3], %s28
      %s31 = sshll.u32 [#allocation2], 4
      %s32 = int_to_ptr.vmem [resolvable:$true] %s31
      %34 = dma.hbm_to_vmem [thread:$0]  %s0, 64, %s32, [#allocation3]
    $region5: #{tpu_custom_call.1} parent=1 // pred_fallthru
      _
    // Predicated region
    $region6: #{tpu_custom_call.1} parent=1 // pred_check
      _
    $region7: #{tpu_custom_call.1} parent=1 // pred_check_branch
      %36 = sbr.rel (0) target = $region9
    $region8: #{tpu_custom_call.1} parent=1 // pred_region
      %s38 = ssub.s32 1024, 1024
      %39 = vsyncadd [#allocation6], %s38
      %s40 = sshll.u32 [#allocation5], 4
      %s41 = int_to_ptr.vmem [resolvable:$true] %s40
      %46 = dma.hbm_to_vmem [thread:$0]  %s1, 1024, %s41, [#allocation6], 64, 64, 4
    $region9: #{tpu_custom_call.1} parent=1 // pred_fallthru
      _
    // Predicated region
    $region10: #{tpu_custom_call.1} parent=1 // pred_check
      _
    $region11: #{tpu_custom_call.1} parent=1 // pred_check_branch
      %48 = sbr.rel (0) target = $region13
    $region12: #{tpu_custom_call.1} parent=1 // pred_region
      _
    $region13: #{tpu_custom_call.1} parent=1 // pred_fallthru
      _
    // Predicated region
    $region14: #{tpu_custom_call.1} parent=1 // pred_check
      _
    $region15: #{tpu_custom_call.1} parent=1 // pred_check_branch
      %50 = sbr.rel (0) target = $region17
    $region16: #{tpu_custom_call.1} parent=1 // pred_region
      _
    $region17: #{tpu_custom_call.1} parent=1 // pred_fallthru
      _
    // Predicated region
    $region18: #{tpu_custom_call.1} parent=1 // pred_check
      _
    $region19: #{tpu_custom_call.1} parent=1 // pred_check_branch
      %52 = sbr.rel (0) target = $region21
    $region20: #{tpu_custom_call.1} parent=1 // pred_region
      %s54 = ssub.s32 1024, 1024
      %55 = vsyncadd [#allocation6], %s54
      %s56 = sshll.u32 [#allocation7], 4
      %s57 = int_to_ptr.vmem [resolvable:$true] %s56
      %62 = dma.hbm_to_vmem [thread:$0]  %s4, 1024, %s57, [#allocation6], 64, 64, 4
    $region21: #{tpu_custom_call.1} parent=1 // pred_fallthru
      _
    // Predicated region
    $region22: #{tpu_custom_call.1} parent=1 // pred_check
      _
    $region23: #{tpu_custom_call.1} parent=1 // pred_check_branch
      %64 = sbr.rel (0) target = $region25
    $region24: #{tpu_custom_call.1} parent=1 // pred_region
      _
    $region25: #{tpu_custom_call.1} parent=1 // pred_fallthru
      _
    // Predicated region
    $region26: #{tpu_custom_call.1} parent=1 // pred_check
      _
    $region27: #{tpu_custom_call.1} parent=1 // pred_check_branch
      %66 = sbr.rel (0) target = $region29
    $region28: #{tpu_custom_call.1} parent=1 // pred_region
      _
    $region29: #{tpu_custom_call.1} parent=1 // pred_fallthru
      _
    // Predicated region
    $region30: #{tpu_custom_call.1} parent=1 // pred_check
      _
    $region31: #{tpu_custom_call.1} parent=1 // pred_check_branch
      %68 = sbr.rel (0) target = $region33
    $region32: #{tpu_custom_call.1} parent=1 // pred_region
      %s70 = ssub.s32 1024, 1024
      %71 = vsyncadd [#allocation9], %s70
      %s72 = sshll.u32 [#allocation8], 4
      %s73 = int_to_ptr.vmem [resolvable:$true] %s72
      %78 = dma.hbm_to_vmem [thread:$0]  %s7, 1024, %s73, [#allocation9], 64, 64, 4
    $region33: #{tpu_custom_call.1} parent=1 // pred_fallthru
      _
    // Predicated region
    $region34: #{tpu_custom_call.1} parent=1 // pred_check
      _
    $region35: #{tpu_custom_call.1} parent=1 // pred_check_branch
      %80 = sbr.rel (0) target = $region37
    $region36: #{tpu_custom_call.1} parent=1 // pred_region
      _
    $region37: #{tpu_custom_call.1} parent=1 // pred_fallthru
      _
    // Predicated region
    $region38: #{tpu_custom_call.1} parent=1 // pred_check
      _
    $region39: #{tpu_custom_call.1} parent=1 // pred_check_branch
      %82 = sbr.rel (0) target = $region41
    $region40: #{tpu_custom_call.1} parent=1 // pred_region
      _
    $region41: #{tpu_custom_call.1} parent=1 // pred_fallthru
      _
    // Predicated region
    $region42: #{tpu_custom_call.1} parent=1 // pred_check
      _
    $region43: #{tpu_custom_call.1} parent=1 // pred_check_branch
      %84 = sbr.rel (0) target = $region45
    $region44: #{tpu_custom_call.1} parent=1 // pred_region
      %s86 = ssub.s32 1024, 1024
      %87 = vsyncadd [#allocation9], %s86
      %s88 = sshll.u32 [#allocation10], 4
      %s89 = int_to_ptr.vmem [resolvable:$true] %s88
      %94 = dma.hbm_to_vmem [thread:$0]  %s10, 1024, %s89, [#allocation9], 64, 64, 4
    $region45: #{tpu_custom_call.1} parent=1 // pred_fallthru
      _
    // Predicated region
    $region46: #{tpu_custom_call.1} parent=1 // pred_check
      _
    $region47: #{tpu_custom_call.1} parent=1 // pred_check_branch
      %96 = sbr.rel (0) target = $region49
    $region48: #{tpu_custom_call.1} parent=1 // pred_region
      _
    $region49: #{tpu_custom_call.1} parent=1 // pred_fallthru
      _
    // Predicated region
    $region50: #{tpu_custom_call.1} parent=1 // pred_check
      _
    $region51: #{tpu_custom_call.1} parent=1 // pred_check_branch
      %98 = sbr.rel (0) target = $region53
    $region52: #{tpu_custom_call.1} parent=1 // pred_region
      _
    $region53: #{tpu_custom_call.1} parent=1 // pred_fallthru
      _
    // Predicated region
    $region54: #{tpu_custom_call.1} parent=1 // pred_check
      _
    $region55: #{tpu_custom_call.1} parent=1 // pred_check_branch
      %100 = sbr.rel (0) target = $region57
    $region56: #{tpu_custom_call.1} parent=1 // pred_region
      %s102 = ssub.s32 1024, 1024
      %103 = vsyncadd [#allocation12], %s102
      %s104 = sshll.u32 [#allocation11], 4
      %s105 = int_to_ptr.vmem [resolvable:$true] %s104
      %110 = dma.hbm_to_vmem [thread:$0]  %s13, 1024, %s105, [#allocation12], 64, 64, 4
    $region57: #{tpu_custom_call.1} parent=1 // pred_fallthru
      _
    // Predicated region
    $region58: #{tpu_custom_call.1} parent=1 // pred_check
      _
    $region59: #{tpu_custom_call.1} parent=1 // pred_check_branch
      %112 = sbr.rel (0) target = $region61
    $region60: #{tpu_custom_call.1} parent=1 // pred_region
      _
    $region61: #{tpu_custom_call.1} parent=1 // pred_fallthru
      _
    // Predicated region
    $region62: #{tpu_custom_call.1} parent=1 // pred_check
      _
    $region63: #{tpu_custom_call.1} parent=1 // pred_check_branch
      %114 = sbr.rel (0) target = $region65
    $region64: #{tpu_custom_call.1} parent=1 // pred_region
      %115 = dma.done [#allocation3], 64
    $region65: #{tpu_custom_call.1} parent=1 // pred_fallthru
      _
    // Predicated region
    $region66: #{tpu_custom_call.1} parent=1 // pred_check
      _
    $region67: #{tpu_custom_call.1} parent=1 // pred_check_branch
      %117 = sbr.rel (0) target = $region69
    $region68: #{tpu_custom_call.1} parent=1 // pred_region
      %118 = dma.done [#allocation6], 1024
    $region69: #{tpu_custom_call.1} parent=1 // pred_fallthru
      _
    // Predicated region
    $region70: #{tpu_custom_call.1} parent=1 // pred_check
      _
    $region71: #{tpu_custom_call.1} parent=1 // pred_check_branch
      %120 = sbr.rel (0) target = $region73
    $region72: #{tpu_custom_call.1} parent=1 // pred_region
      %121 = dma.done [#allocation6], 1024
    $region73: #{tpu_custom_call.1} parent=1 // pred_fallthru
      _
    // Predicated region
    $region74: #{tpu_custom_call.1} parent=1 // pred_check
      _
    $region75: #{tpu_custom_call.1} parent=1 // pred_check_branch
      %123 = sbr.rel (0) target = $region77
    $region76: #{tpu_custom_call.1} parent=1 // pred_region
      %124 = dma.done [#allocation9], 1024
    $region77: #{tpu_custom_call.1} parent=1 // pred_fallthru
      _
    // Predicated region
    $region78: #{tpu_custom_call.1} parent=1 // pred_check
      _
    $region79: #{tpu_custom_call.1} parent=1 // pred_check_branch
      %126 = sbr.rel (0) target = $region81
    $region80: #{tpu_custom_call.1} parent=1 // pred_region
      %127 = dma.done [#allocation9], 1024
    $region81: #{tpu_custom_call.1} parent=1 // pred_fallthru
      _
    // Predicated region
    $region82: #{tpu_custom_call.1} parent=1 // pred_check
      _
    $region83: #{tpu_custom_call.1} parent=1 // pred_check_branch
      %129 = sbr.rel (0) target = $region85
    $region84: #{tpu_custom_call.1} parent=1 // pred_region
      %130 = dma.done [#allocation12], 1024
    $region85: #{tpu_custom_call.1} parent=1 // pred_fallthru
      _
    %v132 = vld [vmem:[#allocation2] sm:$0xf]
    %v133 = vld [vmem:[#allocation5] sm:$0xf]
    %v134 = vld [vmem:[#allocation5 + $0x4] sm:$0xf]
    %v135 = vld [vmem:[#allocation5 + $0x8] sm:$0xf]
    %v136 = vld [vmem:[#allocation5 + $0xc] sm:$0xf]
    %v137 = vld [vmem:[#allocation5 + $0x10] sm:$0xf]
    %v138 = vld [vmem:[#allocation5 + $0x14] sm:$0xf]
    %v139 = vld [vmem:[#allocation5 + $0x18] sm:$0xf]
    %v140 = vld [vmem:[#allocation5 + $0x1c] sm:$0xf]
    %v141 = vld [vmem:[#allocation5 + $0x20] sm:$0xf]
    %v142 = vld [vmem:[#allocation5 + $0x24] sm:$0xf]
    %v143 = vld [vmem:[#allocation5 + $0x28] sm:$0xf]
    %v144 = vld [vmem:[#allocation5 + $0x2c] sm:$0xf]
    %v145 = vld [vmem:[#allocation5 + $0x30] sm:$0xf]
    %v146 = vld [vmem:[#allocation5 + $0x34] sm:$0xf]
    %v147 = vld [vmem:[#allocation5 + $0x38] sm:$0xf]
    %v148 = vld [vmem:[#allocation5 + $0x3c] sm:$0xf]
    %v165 = vunpack.c.l.b16 %v133
    %v166 = vunpack.c.l.b16 %v134
    %v167 = vunpack.c.l.b16 %v135
    %v168 = vunpack.c.l.b16 %v136
    %v169 = vunpack.c.l.b16 %v137
    %v170 = vunpack.c.l.b16 %v138
    %v171 = vunpack.c.l.b16 %v139
    %v172 = vunpack.c.l.b16 %v140
    %v173 = vunpack.c.l.b16 %v141
    %v174 = vunpack.c.l.b16 %v142
    %v175 = vunpack.c.l.b16 %v143
    %v176 = vunpack.c.l.b16 %v144
    %v177 = vunpack.c.l.b16 %v145
    %v178 = vunpack.c.l.b16 %v146
    %v179 = vunpack.c.l.b16 %v147
    %v180 = vunpack.c.l.b16 %v148
    %v181 = vpack.c.b16 %v166, %v165
    %v182 = vpack.c.b16 %v168, %v167
    %v183 = vpack.c.b16 %v170, %v169
    %v184 = vpack.c.b16 %v172, %v171
    %v185 = vpack.c.b16 %v174, %v173
    %v186 = vpack.c.b16 %v176, %v175
    %v187 = vpack.c.b16 %v178, %v177
    %v188 = vpack.c.b16 %v180, %v179
    %197 = vmatprep.subr.bf16.mxu0 0
    %198 = vmatpush1.bf16.msra.mxu0 %v181
    %199 = vmatprep.subr.bf16.mxu0 0
    %200 = vmatpush1.bf16.msra.mxu0 %v182
    %201 = vmatprep.subr.bf16.mxu0 0
    %202 = vmatpush1.bf16.msra.mxu0 %v183
    %203 = vmatprep.subr.bf16.mxu0 0
    %204 = vmatpush1.bf16.msra.mxu0 %v184
    %205 = vmatprep.subr.bf16.mxu0 0
    %206 = vmatpush1.bf16.msra.mxu0 %v185
    %207 = vmatprep.subr.bf16.mxu0 0
    %208 = vmatpush1.bf16.msra.mxu0 %v186
    %209 = vmatprep.subr.bf16.mxu0 0
    %210 = vmatpush1.bf16.msra.mxu0 %v187
    %211 = vmatprep.subr.bf16.mxu0 0
    %212 = vmatpush1.bf16.msra.mxu0 %v188
    %213 = vmatprep.subr.bf16.mxu0 0
    %214 = vmatpush1.bf16.msra.mxu0 0
    %215 = vmatprep.subr.bf16.mxu0 0
    %216 = vmatpush1.bf16.msra.mxu0 0
    %217 = vmatprep.subr.bf16.mxu0 0
    %218 = vmatpush1.bf16.msra.mxu0 0
    %219 = vmatprep.subr.bf16.mxu0 0
    %220 = vmatpush1.bf16.msra.mxu0 0
    %221 = vmatprep.subr.bf16.mxu0 0
    %222 = vmatpush1.bf16.msra.mxu0 0
    %223 = vmatprep.subr.bf16.mxu0 0
    %224 = vmatpush1.bf16.msra.mxu0 0
    %225 = vmatprep.subr.bf16.mxu0 0
    %226 = vmatpush1.bf16.msra.mxu0 0
    %227 = vmatprep.subr.bf16.mxu0 0
    %228 = vmatpush1.bf16.msra.mxu0 0
    %229 = vmatprep.mubr.bf16.mxu0 0
    %230 = vmatmul.mubr.bf16.gmra.mrb[0].mxu0 %v132
    %v231 = vpop.f32.mrb[0].mxu0
    %v232 = vadd.f32 0.0, %v231
    %v233 = vpop.f32.mrb[0].mxu0
    %v234 = vpop.f32.mrb[0].mxu0
    %v235 = vpop.f32.mrb[0].mxu0
    %236 = vdwg.mxu0
    %237 = vadd.xlane.f32.xlu0 %v232
    %v238 = vpop.xlane.xlu0 %237
    %v239 = vrcp.pop 128.0
    %v240 = vmul.f32 %v238, %v239
    %v241 = vsub.f32 %v232, %v240
    %v242 = vmul.f32 %v241, %v241
    %243 = vadd.xlane.f32.xlu0 %v242
    %v244 = vpop.xlane.xlu0 %243
    %v245 = vmul.f32 %v244, %v239
    %v246 = vadd.f32 %v245, 0.001
    %v247 = vrsqrt.pop %v246
    %v248 = vmul.f32 %v241, %v247
    %v249 = vld [vmem:[%s2] sm:$0x1]
    %v251 = vlaneseq
    %v252 = vshrl.u32 %v251, 7
    %v253 = vsub.s32 0, %v252
    %v254 = vrot.slane %v249, %v253
    %v256 = vmul.f32 %v248, %v254
    %v257 = vld [vmem:[%s3] sm:$0x1]
    %v259 = vlaneseq
    %v260 = vshrl.u32 %v259, 7
    %v261 = vsub.s32 0, %v260
    %v262 = vrot.slane %v257, %v261
    %v264 = vadd.f32 %v256, %v262
    %v265 = vxor.u32 %v264, 2147483648
    %v266 = vmul.f32 %v265, 1.442695
    %v267 = vpow.pop %v266
    %v268 = vadd.f32 %v267, 1.0
    %v269 = vrcp.pop %v268
    %v270 = vmul.f32 1.0, %v269
    %v271 = vmul.f32 %v264, %v270
    %v272 = vpack.c.bf16 %v271, %v271
    %v273 = vld [vmem:[#allocation7] sm:$0xf]
    %v274 = vld [vmem:[#allocation7 + $0x4] sm:$0xf]
    %v275 = vld [vmem:[#allocation7 + $0x8] sm:$0xf]
    %v276 = vld [vmem:[#allocation7 + $0xc] sm:$0xf]
    %v277 = vld [vmem:[#allocation7 + $0x10] sm:$0xf]
    %v278 = vld [vmem:[#allocation7 + $0x14] sm:$0xf]
    %v279 = vld [vmem:[#allocation7 + $0x18] sm:$0xf]
    %v280 = vld [vmem:[#allocation7 + $0x1c] sm:$0xf]
    %v281 = vld [vmem:[#allocation7 + $0x20] sm:$0xf]
    %v282 = vld [vmem:[#allocation7 + $0x24] sm:$0xf]
    %v283 = vld [vmem:[#allocation7 + $0x28] sm:$0xf]
    %v284 = vld [vmem:[#allocation7 + $0x2c] sm:$0xf]
    %v285 = vld [vmem:[#allocation7 + $0x30] sm:$0xf]
    %v286 = vld [vmem:[#allocation7 + $0x34] sm:$0xf]
    %v287 = vld [vmem:[#allocation7 + $0x38] sm:$0xf]
    %v288 = vld [vmem:[#allocation7 + $0x3c] sm:$0xf]
    %v305 = vunpack.c.l.b16 %v273
    %v306 = vunpack.c.l.b16 %v274
    %v307 = vunpack.c.l.b16 %v275
    %v308 = vunpack.c.l.b16 %v276
    %v309 = vunpack.c.l.b16 %v277
    %v310 = vunpack.c.l.b16 %v278
    %v311 = vunpack.c.l.b16 %v279
    %v312 = vunpack.c.l.b16 %v280
    %v313 = vunpack.c.l.b16 %v281
    %v314 = vunpack.c.l.b16 %v282
    %v315 = vunpack.c.l.b16 %v283
    %v316 = vunpack.c.l.b16 %v284
    %v317 = vunpack.c.l.b16 %v285
    %v318 = vunpack.c.l.b16 %v286
    %v319 = vunpack.c.l.b16 %v287
    %v320 = vunpack.c.l.b16 %v288
    %v321 = vpack.c.b16 %v306, %v305
    %v322 = vpack.c.b16 %v308, %v307
    %v323 = vpack.c.b16 %v310, %v309
    %v324 = vpack.c.b16 %v312, %v311
    %v325 = vpack.c.b16 %v314, %v313
    %v326 = vpack.c.b16 %v316, %v315
    %v327 = vpack.c.b16 %v318, %v317
    %v328 = vpack.c.b16 %v320, %v319
    %337 = vmatprep.subr.bf16.mxu0 0
    %338 = vmatpush1.bf16.msra.mxu0 %v321
    %339 = vmatprep.subr.bf16.mxu0 0
    %340 = vmatpush1.bf16.msra.mxu0 %v322
    %341 = vmatprep.subr.bf16.mxu0 0
    %342 = vmatpush1.bf16.msra.mxu0 %v323
    %343 = vmatprep.subr.bf16.mxu0 0
    %344 = vmatpush1.bf16.msra.mxu0 %v324
    %345 = vmatprep.subr.bf16.mxu0 0
    %346 = vmatpush1.bf16.msra.mxu0 %v325
    %347 = vmatprep.subr.bf16.mxu0 0
    %348 = vmatpush1.bf16.msra.mxu0 %v326
    %349 = vmatprep.subr.bf16.mxu0 0
    %350 = vmatpush1.bf16.msra.mxu0 %v327
    %351 = vmatprep.subr.bf16.mxu0 0
    %352 = vmatpush1.bf16.msra.mxu0 %v328
    %353 = vmatprep.subr.bf16.mxu0 0
    %354 = vmatpush1.bf16.msra.mxu0 0
    %355 = vmatprep.subr.bf16.mxu0 0
    %356 = vmatpush1.bf16.msra.mxu0 0
    %357 = vmatprep.subr.bf16.mxu0 0
    %358 = vmatpush1.bf16.msra.mxu0 0
    %359 = vmatprep.subr.bf16.mxu0 0
    %360 = vmatpush1.bf16.msra.mxu0 0
    %361 = vmatprep.subr.bf16.mxu0 0
    %362 = vmatpush1.bf16.msra.mxu0 0
    %363 = vmatprep.subr.bf16.mxu0 0
    %364 = vmatpush1.bf16.msra.mxu0 0
    %365 = vmatprep.subr.bf16.mxu0 0
    %366 = vmatpush1.bf16.msra.mxu0 0
    %367 = vmatprep.subr.bf16.mxu0 0
    %368 = vmatpush1.bf16.msra.mxu0 0
    %369 = vmatprep.mubr.bf16.mxu0 0
    %370 = vmatmul.mubr.bf16.gmra.mrb[0].mxu0 %v272
    %v371 = vpop.f32.mrb[0].mxu0
    %v372 = vadd.f32 0.0, %v371
    %v373 = vpop.f32.mrb[0].mxu0
    %v374 = vpop.f32.mrb[0].mxu0
    %v375 = vpop.f32.mrb[0].mxu0
    %376 = vdwg.mxu0
    %377 = vadd.xlane.f32.xlu0 %v372
    %v378 = vpop.xlane.xlu0 %377
    %v379 = vmul.f32 %v378, %v239
    %v380 = vsub.f32 %v372, %v379
    %v381 = vmul.f32 %v380, %v380
    %382 = vadd.xlane.f32.xlu0 %v381
    %v383 = vpop.xlane.xlu0 %382
    %v384 = vmul.f32 %v383, %v239
    %v385 = vadd.f32 %v384, 0.001
    %v386 = vrsqrt.pop %v385
    %v387 = vmul.f32 %v380, %v386
    %v388 = vld [vmem:[%s5] sm:$0x1]
    %v390 = vlaneseq
    %v391 = vshrl.u32 %v390, 7
    %v392 = vsub.s32 0, %v391
    %v393 = vrot.slane %v388, %v392
    %v395 = vmul.f32 %v387, %v393
    %v396 = vld [vmem:[%s6] sm:$0x1]
    %v398 = vlaneseq
    %v399 = vshrl.u32 %v398, 7
    %v400 = vsub.s32 0, %v399
    %v401 = vrot.slane %v396, %v400
    %v403 = vadd.f32 %v395, %v401
    %v404 = vxor.u32 %v403, 2147483648
    %v405 = vmul.f32 %v404, 1.442695
    %v406 = vpow.pop %v405
    %v407 = vadd.f32 %v406, 1.0
    %v408 = vrcp.pop %v407
    %v409 = vmul.f32 1.0, %v408
    %v410 = vmul.f32 %v403, %v409
    %v411 = vpack.c.bf16 %v410, %v410
    %v412 = vld [vmem:[#allocation8] sm:$0xf]
    %v413 = vld [vmem:[#allocation8 + $0x4] sm:$0xf]
    %v414 = vld [vmem:[#allocation8 + $0x8] sm:$0xf]
    %v415 = vld [vmem:[#allocation8 + $0xc] sm:$0xf]
    %v416 = vld [vmem:[#allocation8 + $0x10] sm:$0xf]
    %v417 = vld [vmem:[#allocation8 + $0x14] sm:$0xf]
    %v418 = vld [vmem:[#allocation8 + $0x18] sm:$0xf]
    %v419 = vld [vmem:[#allocation8 + $0x1c] sm:$0xf]
    %v420 = vld [vmem:[#allocation8 + $0x20] sm:$0xf]
    %v421 = vld [vmem:[#allocation8 + $0x24] sm:$0xf]
    %v422 = vld [vmem:[#allocation8 + $0x28] sm:$0xf]
    %v423 = vld [vmem:[#allocation8 + $0x2c] sm:$0xf]
    %v424 = vld [vmem:[#allocation8 + $0x30] sm:$0xf]
    %v425 = vld [vmem:[#allocation8 + $0x34] sm:$0xf]
    %v426 = vld [vmem:[#allocation8 + $0x38] sm:$0xf]
    %v427 = vld [vmem:[#allocation8 + $0x3c] sm:$0xf]
    %v444 = vunpack.c.l.b16 %v412
    %v445 = vunpack.c.l.b16 %v413
    %v446 = vunpack.c.l.b16 %v414
    %v447 = vunpack.c.l.b16 %v415
    %v448 = vunpack.c.l.b16 %v416
    %v449 = vunpack.c.l.b16 %v417
    %v450 = vunpack.c.l.b16 %v418
    %v451 = vunpack.c.l.b16 %v419
    %v452 = vunpack.c.l.b16 %v420
    %v453 = vunpack.c.l.b16 %v421
    %v454 = vunpack.c.l.b16 %v422
    %v455 = vunpack.c.l.b16 %v423
    %v456 = vunpack.c.l.b16 %v424
    %v457 = vunpack.c.l.b16 %v425
    %v458 = vunpack.c.l.b16 %v426
    %v459 = vunpack.c.l.b16 %v427
    %v460 = vpack.c.b16 %v445, %v444
    %v461 = vpack.c.b16 %v447, %v446
    %v462 = vpack.c.b16 %v449, %v448
    %v463 = vpack.c.b16 %v451, %v450
    %v464 = vpack.c.b16 %v453, %v452
    %v465 = vpack.c.b16 %v455, %v454
    %v466 = vpack.c.b16 %v457, %v456
    %v467 = vpack.c.b16 %v459, %v458
    %476 = vmatprep.subr.bf16.mxu0 0
    %477 = vmatpush1.bf16.msra.mxu0 %v460
    %478 = vmatprep.subr.bf16.mxu0 0
    %479 = vmatpush1.bf16.msra.mxu0 %v461
    %480 = vmatprep.subr.bf16.mxu0 0
    %481 = vmatpush1.bf16.msra.mxu0 %v462
    %482 = vmatprep.subr.bf16.mxu0 0
    %483 = vmatpush1.bf16.msra.mxu0 %v463
    %484 = vmatprep.subr.bf16.mxu0 0
    %485 = vmatpush1.bf16.msra.mxu0 %v464
    %486 = vmatprep.subr.bf16.mxu0 0
    %487 = vmatpush1.bf16.msra.mxu0 %v465
    %488 = vmatprep.subr.bf16.mxu0 0
    %489 = vmatpush1.bf16.msra.mxu0 %v466
    %490 = vmatprep.subr.bf16.mxu0 0
    %491 = vmatpush1.bf16.msra.mxu0 %v467
    %492 = vmatprep.subr.bf16.mxu0 0
    %493 = vmatpush1.bf16.msra.mxu0 0
    %494 = vmatprep.subr.bf16.mxu0 0
    %495 = vmatpush1.bf16.msra.mxu0 0
    %496 = vmatprep.subr.bf16.mxu0 0
    %497 = vmatpush1.bf16.msra.mxu0 0
    %498 = vmatprep.subr.bf16.mxu0 0
    %499 = vmatpush1.bf16.msra.mxu0 0
    %500 = vmatprep.subr.bf16.mxu0 0
    %501 = vmatpush1.bf16.msra.mxu0 0
    %502 = vmatprep.subr.bf16.mxu0 0
    %503 = vmatpush1.bf16.msra.mxu0 0
    %504 = vmatprep.subr.bf16.mxu0 0
    %505 = vmatpush1.bf16.msra.mxu0 0
    %506 = vmatprep.subr.bf16.mxu0 0
    %507 = vmatpush1.bf16.msra.mxu0 0
    %508 = vmatprep.mubr.bf16.mxu0 0
    %509 = vmatmul.mubr.bf16.gmra.mrb[0].mxu0 %v411
    %v510 = vpop.f32.mrb[0].mxu0
    %v511 = vadd.f32 0.0, %v510
    %v512 = vpop.f32.mrb[0].mxu0
    %v513 = vpop.f32.mrb[0].mxu0
    %v514 = vpop.f32.mrb[0].mxu0
    %515 = vdwg.mxu0
    %516 = vadd.xlane.f32.xlu0 %v511
    %v517 = vpop.xlane.xlu0 %516
    %v518 = vmul.f32 %v517, %v239
    %v519 = vsub.f32 %v511, %v518
    %v520 = vmul.f32 %v519, %v519
    %521 = vadd.xlane.f32.xlu0 %v520
    %v522 = vpop.xlane.xlu0 %521
    %v523 = vmul.f32 %v522, %v239
    %v524 = vadd.f32 %v523, 0.001
    %v525 = vrsqrt.pop %v524
    %v526 = vmul.f32 %v519, %v525
    %v527 = vld [vmem:[%s8] sm:$0x1]
    %v529 = vlaneseq
    %v530 = vshrl.u32 %v529, 7
    %v531 = vsub.s32 0, %v530
    %v532 = vrot.slane %v527, %v531
    %v534 = vmul.f32 %v526, %v532
    %v535 = vld [vmem:[%s9] sm:$0x1]
    %v537 = vlaneseq
    %v538 = vshrl.u32 %v537, 7
    %v539 = vsub.s32 0, %v538
    %v540 = vrot.slane %v535, %v539
    %v542 = vadd.f32 %v534, %v540
    %v543 = vxor.u32 %v542, 2147483648
    %v544 = vmul.f32 %v543, 1.442695
    %v545 = vpow.pop %v544
    %v546 = vadd.f32 %v545, 1.0
    %v547 = vrcp.pop %v546
    %v548 = vmul.f32 1.0, %v547
    %v549 = vmul.f32 %v542, %v548
    %v550 = vpack.c.bf16 %v549, %v549
    %v551 = vld [vmem:[#allocation10] sm:$0xf]
    %v552 = vld [vmem:[#allocation10 + $0x4] sm:$0xf]
    %v553 = vld [vmem:[#allocation10 + $0x8] sm:$0xf]
    %v554 = vld [vmem:[#allocation10 + $0xc] sm:$0xf]
    %v555 = vld [vmem:[#allocation10 + $0x10] sm:$0xf]
    %v556 = vld [vmem:[#allocation10 + $0x14] sm:$0xf]
    %v557 = vld [vmem:[#allocation10 + $0x18] sm:$0xf]
    %v558 = vld [vmem:[#allocation10 + $0x1c] sm:$0xf]
    %v559 = vld [vmem:[#allocation10 + $0x20] sm:$0xf]
    %v560 = vld [vmem:[#allocation10 + $0x24] sm:$0xf]
    %v561 = vld [vmem:[#allocation10 + $0x28] sm:$0xf]
    %v562 = vld [vmem:[#allocation10 + $0x2c] sm:$0xf]
    %v563 = vld [vmem:[#allocation10 + $0x30] sm:$0xf]
    %v564 = vld [vmem:[#allocation10 + $0x34] sm:$0xf]
    %v565 = vld [vmem:[#allocation10 + $0x38] sm:$0xf]
    %v566 = vld [vmem:[#allocation10 + $0x3c] sm:$0xf]
    %v583 = vunpack.c.l.b16 %v551
    %v584 = vunpack.c.l.b16 %v552
    %v585 = vunpack.c.l.b16 %v553
    %v586 = vunpack.c.l.b16 %v554
    %v587 = vunpack.c.l.b16 %v555
    %v588 = vunpack.c.l.b16 %v556
    %v589 = vunpack.c.l.b16 %v557
    %v590 = vunpack.c.l.b16 %v558
    %v591 = vunpack.c.l.b16 %v559
    %v592 = vunpack.c.l.b16 %v560
    %v593 = vunpack.c.l.b16 %v561
    %v594 = vunpack.c.l.b16 %v562
    %v595 = vunpack.c.l.b16 %v563
    %v596 = vunpack.c.l.b16 %v564
    %v597 = vunpack.c.l.b16 %v565
    %v598 = vunpack.c.l.b16 %v566
    %v599 = vpack.c.b16 %v584, %v583
    %v600 = vpack.c.b16 %v586, %v585
    %v601 = vpack.c.b16 %v588, %v587
    %v602 = vpack.c.b16 %v590, %v589
    %v603 = vpack.c.b16 %v592, %v591
    %v604 = vpack.c.b16 %v594, %v593
    %v605 = vpack.c.b16 %v596, %v595
    %v606 = vpack.c.b16 %v598, %v597
    %615 = vmatprep.subr.bf16.mxu0 0
    %616 = vmatpush1.bf16.msra.mxu0 %v599
    %617 = vmatprep.subr.bf16.mxu0 0
    %618 = vmatpush1.bf16.msra.mxu0 %v600
    %619 = vmatprep.subr.bf16.mxu0 0
    %620 = vmatpush1.bf16.msra.mxu0 %v601
    %621 = vmatprep.subr.bf16.mxu0 0
    %622 = vmatpush1.bf16.msra.mxu0 %v602
    %623 = vmatprep.subr.bf16.mxu0 0
    %624 = vmatpush1.bf16.msra.mxu0 %v603
    %625 = vmatprep.subr.bf16.mxu0 0
    %626 = vmatpush1.bf16.msra.mxu0 %v604
    %627 = vmatprep.subr.bf16.mxu0 0
    %628 = vmatpush1.bf16.msra.mxu0 %v605
    %629 = vmatprep.subr.bf16.mxu0 0
    %630 = vmatpush1.bf16.msra.mxu0 %v606
    %631 = vmatprep.subr.bf16.mxu0 0
    %632 = vmatpush1.bf16.msra.mxu0 0
    %633 = vmatprep.subr.bf16.mxu0 0
    %634 = vmatpush1.bf16.msra.mxu0 0
    %635 = vmatprep.subr.bf16.mxu0 0
    %636 = vmatpush1.bf16.msra.mxu0 0
    %637 = vmatprep.subr.bf16.mxu0 0
    %638 = vmatpush1.bf16.msra.mxu0 0
    %639 = vmatprep.subr.bf16.mxu0 0
    %640 = vmatpush1.bf16.msra.mxu0 0
    %641 = vmatprep.subr.bf16.mxu0 0
    %642 = vmatpush1.bf16.msra.mxu0 0
    %643 = vmatprep.subr.bf16.mxu0 0
    %644 = vmatpush1.bf16.msra.mxu0 0
    %645 = vmatprep.subr.bf16.mxu0 0
    %646 = vmatpush1.bf16.msra.mxu0 0
    %647 = vmatprep.mubr.bf16.mxu0 0
    %648 = vmatmul.mubr.bf16.gmra.mrb[0].mxu0 %v550
    %v649 = vpop.f32.mrb[0].mxu0
    %v650 = vadd.f32 0.0, %v649
    %v651 = vpop.f32.mrb[0].mxu0
    %v652 = vpop.f32.mrb[0].mxu0
    %v653 = vpop.f32.mrb[0].mxu0
    %654 = vdwg.mxu0
    %655 = vadd.xlane.f32.xlu0 %v650
    %v656 = vpop.xlane.xlu0 %655
    %v657 = vmul.f32 %v656, %v239
    %v658 = vsub.f32 %v650, %v657
    %v659 = vmul.f32 %v658, %v658
    %660 = vadd.xlane.f32.xlu0 %v659
    %v661 = vpop.xlane.xlu0 %660
    %v662 = vmul.f32 %v661, %v239
    %v663 = vadd.f32 %v662, 0.001
    %v664 = vrsqrt.pop %v663
    %v665 = vmul.f32 %v658, %v664
    %v666 = vld [vmem:[%s11] sm:$0x1]
    %v668 = vlaneseq
    %v669 = vshrl.u32 %v668, 7
    %v670 = vsub.s32 0, %v669
    %v671 = vrot.slane %v666, %v670
    %v673 = vmul.f32 %v665, %v671
    %v674 = vld [vmem:[%s12] sm:$0x1]
    %v676 = vlaneseq
    %v677 = vshrl.u32 %v676, 7
    %v678 = vsub.s32 0, %v677
    %v679 = vrot.slane %v674, %v678
    %v681 = vadd.f32 %v673, %v679
    %v682 = vxor.u32 %v681, 2147483648
    %v683 = vmul.f32 %v682, 1.442695
    %v684 = vpow.pop %v683
    %v685 = vadd.f32 %v684, 1.0
    %v686 = vrcp.pop %v685
    %v687 = vmul.f32 1.0, %v686
    %v688 = vmul.f32 %v681, %v687
    %v689 = vpack.c.bf16 %v688, %v688
    %v690 = vld [vmem:[#allocation11] sm:$0xf]
    %v691 = vld [vmem:[#allocation11 + $0x4] sm:$0xf]
    %v692 = vld [vmem:[#allocation11 + $0x8] sm:$0xf]
    %v693 = vld [vmem:[#allocation11 + $0xc] sm:$0xf]
    %v694 = vld [vmem:[#allocation11 + $0x10] sm:$0xf]
    %v695 = vld [vmem:[#allocation11 + $0x14] sm:$0xf]
    %v696 = vld [vmem:[#allocation11 + $0x18] sm:$0xf]
    %v697 = vld [vmem:[#allocation11 + $0x1c] sm:$0xf]
    %v698 = vld [vmem:[#allocation11 + $0x20] sm:$0xf]
    %v699 = vld [vmem:[#allocation11 + $0x24] sm:$0xf]
    %v700 = vld [vmem:[#allocation11 + $0x28] sm:$0xf]
    %v701 = vld [vmem:[#allocation11 + $0x2c] sm:$0xf]
    %v702 = vld [vmem:[#allocation11 + $0x30] sm:$0xf]
    %v703 = vld [vmem:[#allocation11 + $0x34] sm:$0xf]
    %v704 = vld [vmem:[#allocation11 + $0x38] sm:$0xf]
    %v705 = vld [vmem:[#allocation11 + $0x3c] sm:$0xf]
    %v706 = vld [vmem:[%s14] sm:$0x1]
    %v708 = vlaneseq
    %v709 = vshrl.u32 %v708, 7
    %v710 = vsub.s32 0, %v709
    %v711 = vrot.slane %v706, %v710
    %v729 = vunpack.c.l.b16 %v690
    %v730 = vunpack.c.l.b16 %v691
    %v731 = vunpack.c.l.b16 %v692
    %v732 = vunpack.c.l.b16 %v693
    %v733 = vunpack.c.l.b16 %v694
    %v734 = vunpack.c.l.b16 %v695
    %v735 = vunpack.c.l.b16 %v696
    %v736 = vunpack.c.l.b16 %v697
    %v737 = vunpack.c.l.b16 %v698
    %v738 = vunpack.c.l.b16 %v699
    %v739 = vunpack.c.l.b16 %v700
    %v740 = vunpack.c.l.b16 %v701
    %v741 = vunpack.c.l.b16 %v702
    %v742 = vunpack.c.l.b16 %v703
    %v743 = vunpack.c.l.b16 %v704
    %v744 = vunpack.c.l.b16 %v705
    %v745 = vpack.c.b16 %v730, %v729
    %v746 = vpack.c.b16 %v732, %v731
    %v747 = vpack.c.b16 %v734, %v733
    %v748 = vpack.c.b16 %v736, %v735
    %v749 = vpack.c.b16 %v738, %v737
    %v750 = vpack.c.b16 %v740, %v739
    %v751 = vpack.c.b16 %v742, %v741
    %v752 = vpack.c.b16 %v744, %v743
    %761 = vmatprep.subr.bf16.mxu0 0
    %762 = vmatpush1.bf16.msra.mxu0 %v745
    %763 = vmatprep.subr.bf16.mxu0 0
    %764 = vmatpush1.bf16.msra.mxu0 %v746
    %765 = vmatprep.subr.bf16.mxu0 0
    %766 = vmatpush1.bf16.msra.mxu0 %v747
    %767 = vmatprep.subr.bf16.mxu0 0
    %768 = vmatpush1.bf16.msra.mxu0 %v748
    %769 = vmatprep.subr.bf16.mxu0 0
    %770 = vmatpush1.bf16.msra.mxu0 %v749
    %771 = vmatprep.subr.bf16.mxu0 0
    %772 = vmatpush1.bf16.msra.mxu0 %v750
    %773 = vmatprep.subr.bf16.mxu0 0
    %774 = vmatpush1.bf16.msra.mxu0 %v751
    %775 = vmatprep.subr.bf16.mxu0 0
    %776 = vmatpush1.bf16.msra.mxu0 %v752
    %777 = vmatprep.subr.bf16.mxu0 0
    %778 = vmatpush1.bf16.msra.mxu0 0
    %779 = vmatprep.subr.bf16.mxu0 0
    %780 = vmatpush1.bf16.msra.mxu0 0
    %781 = vmatprep.subr.bf16.mxu0 0
    %782 = vmatpush1.bf16.msra.mxu0 0
    %783 = vmatprep.subr.bf16.mxu0 0
    %784 = vmatpush1.bf16.msra.mxu0 0
    %785 = vmatprep.subr.bf16.mxu0 0
    %786 = vmatpush1.bf16.msra.mxu0 0
    %787 = vmatprep.subr.bf16.mxu0 0
    %788 = vmatpush1.bf16.msra.mxu0 0
    %789 = vmatprep.subr.bf16.mxu0 0
    %790 = vmatpush1.bf16.msra.mxu0 0
    %791 = vmatprep.subr.bf16.mxu0 0
    %792 = vmatpush1.bf16.msra.mxu0 0
    %793 = vmatprep.mubr.bf16.mxu0 0
    %794 = vmatmul.mubr.bf16.gmra.mrb[0].mxu0 %v689
    %v795 = vpop.f32.mrb[0].mxu0
    %v796 = vadd.f32 %v711, %v795
    %v797 = vpop.f32.mrb[0].mxu0
    %v798 = vpop.f32.mrb[0].mxu0
    %v799 = vpop.f32.mrb[0].mxu0
    %800 = vdwg.mxu0
    %801 = vst [vmem:[#allocation13] sm:$0xff] %v796
    // Predicated region
    $region86: #{tpu_custom_call.1} parent=1 // pred_check
      _
    $region87: #{tpu_custom_call.1} parent=1 // pred_check_branch
      %803 = sbr.rel (0) target = $region89
    $region88: #{tpu_custom_call.1} parent=1 // pred_region
      %s805 = ssub.s32 128, 128
      %806 = vsyncadd [#allocation4], %s805
      %s808 = sshll.u32 [#allocation13], 4
      %s809 = int_to_ptr.vmem [resolvable:$true] %s808
      %811 = dma.vmem_to_hbm [thread:$0]  %s809, 128, %s15, [#allocation4]
    $region89: #{tpu_custom_call.1} parent=1 // pred_fallthru
      _
    // Predicated region
    $region90: #{tpu_custom_call.1} parent=1 // pred_check
      _
    $region91: #{tpu_custom_call.1} parent=1 // pred_check_branch
      %813 = sbr.rel (0) target = $region93
    $region92: #{tpu_custom_call.1} parent=1 // pred_region
      %814 = dma.done [#allocation4], 128
    $region93: #{tpu_custom_call.1} parent=1 // pred_fallthru
      _
    %815 = vsyncpa [#allocation3], 1
    %816 = vsyncpa [#allocation6], 1
    %817 = vsyncpa [#allocation9], 1
    %818 = vsyncpa [#allocation12], 1
    %819 = vsyncpa [#allocation4], 1

</llo_original>
